<compile_context>
chip_gen: v7x
topology: tpu7x:2x2x1
jax: 0.10.0
libtpu: 0.0.40
codegen_flags: <defaults>
</compile_context>

<pallas_src>
import jax
import jax.numpy as jnp
from jax.experimental import pallas as pl
from jax.experimental.pallas import tpu as pltpu


_LANE = 128
_SUBLANE = 8
# Per-stream block byte target: the measured tile-size sweep plateaus around
# 1 MiB blocks (~85% of HBM roofline); 4 MiB keeps DMAs fat while the total
# double/triple-buffered footprint stays well inside every generation's VMEM.
_MAX_BLOCK_BYTES = 4 << 20
_MAX_BATCH_UNROLL = 64        # caps the static per-batch unroll in the kernel
_MAX_SEQ_TILE = 512


def _round_up(x, m):
    return (x + m - 1) // m * m


def _pick_seq_tile(s_padded):
    """Largest divisor of s_padded that is a multiple of 8 and <= _MAX_SEQ_TILE."""
    best = _SUBLANE
    d = _SUBLANE
    limit = min(s_padded, _MAX_SEQ_TILE)
    while d <= limit:
        if s_padded % d == 0:
            best = d
        d += _SUBLANE
    return best


def _residual_permute_add_kernel(pre_ref, new_ref, out_ref):
    """out[b, s, :] = pre[s, b, :] + new[b, s, :] for the current (batch, seq) tile.

    pre_ref : [S_tile, bb*Dp]  -- lane columns [b*Dp, (b+1)*Dp) hold pre[:, b, :]
    new_ref : [bb, S_tile, Dp]
    out_ref : [bb, S_tile, Dp]
    """
    bb, _, dp = out_ref.shape
    # bb is a small compile-time constant: the static unroll keeps every slice
    # static and 128-lane aligned, so each iteration is a plain [S_tile, Dp]
    # full-lane vector add followed by an unmasked contiguous store.
    for b in range(bb):
        out_ref[b] = pre_ref[:, b * dp:(b + 1) * dp] + new_ref[b]


def normalize_layer_forward(pre_input, new_output):
    """NormalizeLayer.forward: pre_input.permute(1, 0, 2) + dropout(new_output).

    pre_input : [S, B, D]   (seq-major)
    new_output: [B, S, D]   (batch-major)
    returns   : [B, S, D]

    Dropout is applied in eval mode (identity).
    """
    S, B, D = pre_input.shape
    assert new_output.shape == (B, S, D), (pre_input.shape, new_output.shape)

    out_dtype = jnp.result_type(pre_input.dtype, new_output.dtype)
    itemsize = jnp.dtype(out_dtype).itemsize

    # ---- Tile selection (VMEM-budget / HBM-roofline driven) -----------------
    # Lane dim: pad D to a multiple of 128 so every slice/store is full-lane.
    Dp = _round_up(D, _LANE)
    # Sequence: pad to a sublane multiple, then tile with the largest aligned
    # divisor <= 512 so blocks stay VMEM-budgeted for long sequences.
    Sp = _round_up(S, _SUBLANE)
    s_tile = _pick_seq_tile(Sp)
    # Batch chunk: as large as the per-stream block budget allows.  Bigger bb
    # grows the contiguous segment of the strided `pre` DMA (bb*Dp*itemsize
    # bytes per row) and shrinks the number of ~0.35us grid-step overheads.
    bb = max(1, min(B, _MAX_BATCH_UNROLL,
                    _MAX_BLOCK_BYTES // (s_tile * Dp * itemsize)))
    Bp = _round_up(B, bb)
    n_b = Bp // bb
    n_s = Sp // s_tile
    # Keep at least 2 grid steps when possible so the "parallel" axes can be
    # sharded across the two TensorCores on v7x (one core idle otherwise).
    if n_b * n_s < 2 and B >= 2:
        bb = (B + 1) // 2
        Bp = 2 * bb
        n_b = 2

    # ---- Pad (no-op / elided by XLA when shapes are already aligned) --------
    pre_p = pre_input
    new_p = new_output
    needs_pad = (Sp, Bp, Dp) != (S, B, D)
    if needs_pad:
        pre_p = jnp.pad(pre_input, ((0, Sp - S), (0, Bp - B), (0, Dp - D)))
        new_p = jnp.pad(new_output, ((0, Bp - B), (0, Sp - S), (0, Dp - D)))

    # Free row-major view [Sp, Bp, Dp] -> [Sp, Bp*Dp]: the (1, 0, 2) permute
    # becomes block-index arithmetic inside the DMA -- lane columns
    # [b*Dp, (b+1)*Dp) of row s are exactly pre_input[s, b, :].
    pre2d = pre_p.reshape(Sp, Bp * Dp)

    block_bytes = bb * s_tile * Dp * itemsize
    # 3 buffers for the (strided, slower) pre stream + 2 each for new/out.
    vmem_needed = 7 * block_bytes
    # Budget against v7x (64 MiB physical): never below the 32 MiB default
    # scoped limit, never above 48 MiB.  v5e/v6e (128 MiB) trivially satisfy.
    vmem_limit = int(min(max(2 * vmem_needed, 32 << 20), 48 << 20))

    # The strided pre DMA has lower effective bandwidth than the contiguous
    # new/out streams; give it one extra pipeline buffer when the grid is deep
    # enough for the extra depth to matter.
    pre_spec_kwargs = {}
    if n_b * n_s >= 3:
        pre_spec_kwargs["pipeline_mode"] = pl.Buffered(3)
    pre_spec = pl.BlockSpec((s_tile, bb * Dp), lambda i, j: (j, i),
                            **pre_spec_kwargs)

    total_elems = Bp * Sp * Dp
    cost = pl.CostEstimate(flops=total_elems, transcendentals=0,
                           bytes_accessed=3 * total_elems * itemsize)

    out_padded = pl.pallas_call(
        _residual_permute_add_kernel,
        out_shape=jax.ShapeDtypeStruct((Bp, Sp, Dp), out_dtype),
        grid=(n_b, n_s),
        in_specs=[
            pre_spec,                                                # pre (permute via DMA)
            pl.BlockSpec((bb, s_tile, Dp), lambda i, j: (i, j, 0)),  # new_output
        ],
        out_specs=pl.BlockSpec((bb, s_tile, Dp), lambda i, j: (i, j, 0)),
        compiler_params=pltpu.CompilerParams(
            dimension_semantics=("parallel", "parallel"),
            vmem_limit_bytes=vmem_limit),
        cost_estimate=cost,
    )(pre2d, new_p)

    if needs_pad:
        out_padded = out_padded[:B, :S, :D]
    return out_padded


if __name__ == "__main__":
    key = jax.random.PRNGKey(0)
    fwd = jax.jit(normalize_layer_forward)

    # Two small configs: one fully lane/sublane aligned, one exercising the
    # wrapper padding path (S not a multiple of 8, D not a multiple of 128).
    for (S, B, D) in [(8, 16, 256), (12, 6, 160)]:
        k_pre, k_new, key = jax.random.split(key, 3)
        pre_input = jax.random.normal(k_pre, (S, B, D), jnp.float32)
        new_output = jax.random.normal(k_new, (B, S, D), jnp.float32)

        out = fwd(pre_input, new_output)
        jax.block_until_ready(out)

        # Pure-JAX reference (dropout in eval mode = identity).
        expected = jnp.transpose(pre_input, (1, 0, 2)) + new_output
        assert out.shape == (B, S, D)
        assert jnp.allclose(out, expected, atol=1e-6, rtol=1e-6), (S, B, D)

    print("KERNEL_OK")
</pallas_src>

<mosaic_0001>
module attributes {stable_mosaic.version = 11 : i64} {
  func.func @_residual_permute_add_kernel(%arg0: i32, %arg1: i32, %arg2: memref<8x2048xf32, #tpu.memory_space<vmem>>, %arg3: memref<8x8x256xf32, #tpu.memory_space<vmem>>, %arg4: memref<8x8x256xf32, #tpu.memory_space<vmem>>) attributes {dimension_semantics = [#tpu.dimension_semantics<parallel>, #tpu.dimension_semantics<parallel>], iteration_bounds = array<i64: 2, 1>, scalar_prefetch = 0 : i64, scratch_operands = 0 : i64, tpu.core_type = #tpu.core_type<tc>, window_params = [{transform_indices = @transform_0, window_bounds = array<i64: 8, 2048>}, {transform_indices = @transform_1, window_bounds = array<i64: 8, 8, 256>}, {transform_indices = @transform_2, window_bounds = array<i64: 8, 8, 256>}]} {
    %c0 = arith.constant 0 : index
    %c0_0 = arith.constant 0 : index
    %0 = vector.load %arg2[%c0, %c0_0] : memref<8x2048xf32, #tpu.memory_space<vmem>>, vector<8x256xf32>
    %c0_1 = arith.constant 0 : index
    %c0_2 = arith.constant 0 : index
    %c0_3 = arith.constant 0 : index
    %1 = vector.load %arg3[%c0_1, %c0_2, %c0_3] : memref<8x8x256xf32, #tpu.memory_space<vmem>>, vector<1x8x256xf32>
    %2 = vector.shape_cast %1 : vector<1x8x256xf32> to vector<8x256xf32>
    %3 = arith.addf %0, %2 : vector<8x256xf32>
    %c0_4 = arith.constant 0 : index
    %c0_5 = arith.constant 0 : index
    %c0_6 = arith.constant 0 : index
    %4 = vector.load %arg4[%c0_4, %c0_5, %c0_6] : memref<8x8x256xf32, #tpu.memory_space<vmem>>, vector<1x8x256xf32>
    %5 = vector.shape_cast %4 : vector<1x8x256xf32> to vector<8x256xf32>
    %6 = vector.shape_cast %3 : vector<8x256xf32> to vector<1x8x256xf32>
    tpu.vector_store %arg4[%c0_4, %c0_5, %c0_6], %6 {strides = array<i32>} : memref<8x8x256xf32, #tpu.memory_space<vmem>>, vector<1x8x256xf32>,
    %c0_7 = arith.constant 0 : index
    %c256 = arith.constant 256 : index
    %7 = vector.load %arg2[%c0_7, %c256] : memref<8x2048xf32, #tpu.memory_space<vmem>>, vector<8x256xf32>
    %c1 = arith.constant 1 : index
    %c0_8 = arith.constant 0 : index
    %c0_9 = arith.constant 0 : index
    %8 = vector.load %arg3[%c1, %c0_8, %c0_9] : memref<8x8x256xf32, #tpu.memory_space<vmem>>, vector<1x8x256xf32>
    %9 = vector.shape_cast %8 : vector<1x8x256xf32> to vector<8x256xf32>
    %10 = arith.addf %7, %9 : vector<8x256xf32>
    %c1_10 = arith.constant 1 : index
    %c0_11 = arith.constant 0 : index
    %c0_12 = arith.constant 0 : index
    %11 = vector.load %arg4[%c1_10, %c0_11, %c0_12] : memref<8x8x256xf32, #tpu.memory_space<vmem>>, vector<1x8x256xf32>
    %12 = vector.shape_cast %11 : vector<1x8x256xf32> to vector<8x256xf32>
    %13 = vector.shape_cast %10 : vector<8x256xf32> to vector<1x8x256xf32>
    tpu.vector_store %arg4[%c1_10, %c0_11, %c0_12], %13 {strides = array<i32>} : memref<8x8x256xf32, #tpu.memory_space<vmem>>, vector<1x8x256xf32>,
    %c0_13 = arith.constant 0 : index
    %c512 = arith.constant 512 : index
    %14 = vector.load %arg2[%c0_13, %c512] : memref<8x2048xf32, #tpu.memory_space<vmem>>, vector<8x256xf32>
    %c2 = arith.constant 2 : index
    %c0_14 = arith.constant 0 : index
    %c0_15 = arith.constant 0 : index
    %15 = vector.load %arg3[%c2, %c0_14, %c0_15] : memref<8x8x256xf32, #tpu.memory_space<vmem>>, vector<1x8x256xf32>
    %16 = vector.shape_cast %15 : vector<1x8x256xf32> to vector<8x256xf32>
    %17 = arith.addf %14, %16 : vector<8x256xf32>
    %c2_16 = arith.constant 2 : index
    %c0_17 = arith.constant 0 : index
    %c0_18 = arith.constant 0 : index
    %18 = vector.load %arg4[%c2_16, %c0_17, %c0_18] : memref<8x8x256xf32, #tpu.memory_space<vmem>>, vector<1x8x256xf32>
    %19 = vector.shape_cast %18 : vector<1x8x256xf32> to vector<8x256xf32>
    %20 = vector.shape_cast %17 : vector<8x256xf32> to vector<1x8x256xf32>
    tpu.vector_store %arg4[%c2_16, %c0_17, %c0_18], %20 {strides = array<i32>} : memref<8x8x256xf32, #tpu.memory_space<vmem>>, vector<1x8x256xf32>,
    %c0_19 = arith.constant 0 : index
    %c768 = arith.constant 768 : index
    %21 = vector.load %arg2[%c0_19, %c768] : memref<8x2048xf32, #tpu.memory_space<vmem>>, vector<8x256xf32>
    %c3 = arith.constant 3 : index
    %c0_20 = arith.constant 0 : index
    %c0_21 = arith.constant 0 : index
    %22 = vector.load %arg3[%c3, %c0_20, %c0_21] : memref<8x8x256xf32, #tpu.memory_space<vmem>>, vector<1x8x256xf32>
    %23 = vector.shape_cast %22 : vector<1x8x256xf32> to vector<8x256xf32>
    %24 = arith.addf %21, %23 : vector<8x256xf32>
    %c3_22 = arith.constant 3 : index
    %c0_23 = arith.constant 0 : index
    %c0_24 = arith.constant 0 : index
    %25 = vector.load %arg4[%c3_22, %c0_23, %c0_24] : memref<8x8x256xf32, #tpu.memory_space<vmem>>, vector<1x8x256xf32>
    %26 = vector.shape_cast %25 : vector<1x8x256xf32> to vector<8x256xf32>
    %27 = vector.shape_cast %24 : vector<8x256xf32> to vector<1x8x256xf32>
    tpu.vector_store %arg4[%c3_22, %c0_23, %c0_24], %27 {strides = array<i32>} : memref<8x8x256xf32, #tpu.memory_space<vmem>>, vector<1x8x256xf32>,
    %c0_25 = arith.constant 0 : index
    %c1024 = arith.constant 1024 : index
    %28 = vector.load %arg2[%c0_25, %c1024] : memref<8x2048xf32, #tpu.memory_space<vmem>>, vector<8x256xf32>
    %c4 = arith.constant 4 : index
    %c0_26 = arith.constant 0 : index
    %c0_27 = arith.constant 0 : index
    %29 = vector.load %arg3[%c4, %c0_26, %c0_27] : memref<8x8x256xf32, #tpu.memory_space<vmem>>, vector<1x8x256xf32>
    %30 = vector.shape_cast %29 : vector<1x8x256xf32> to vector<8x256xf32>
    %31 = arith.addf %28, %30 : vector<8x256xf32>
    %c4_28 = arith.constant 4 : index
    %c0_29 = arith.constant 0 : index
    %c0_30 = arith.constant 0 : index
    %32 = vector.load %arg4[%c4_28, %c0_29, %c0_30] : memref<8x8x256xf32, #tpu.memory_space<vmem>>, vector<1x8x256xf32>
    %33 = vector.shape_cast %32 : vector<1x8x256xf32> to vector<8x256xf32>
    %34 = vector.shape_cast %31 : vector<8x256xf32> to vector<1x8x256xf32>
    tpu.vector_store %arg4[%c4_28, %c0_29, %c0_30], %34 {strides = array<i32>} : memref<8x8x256xf32, #tpu.memory_space<vmem>>, vector<1x8x256xf32>,
    %c0_31 = arith.constant 0 : index
    %c1280 = arith.constant 1280 : index
    %35 = vector.load %arg2[%c0_31, %c1280] : memref<8x2048xf32, #tpu.memory_space<vmem>>, vector<8x256xf32>
    %c5 = arith.constant 5 : index
    %c0_32 = arith.constant 0 : index
    %c0_33 = arith.constant 0 : index
    %36 = vector.load %arg3[%c5, %c0_32, %c0_33] : memref<8x8x256xf32, #tpu.memory_space<vmem>>, vector<1x8x256xf32>
    %37 = vector.shape_cast %36 : vector<1x8x256xf32> to vector<8x256xf32>
    %38 = arith.addf %35, %37 : vector<8x256xf32>
    %c5_34 = arith.constant 5 : index
    %c0_35 = arith.constant 0 : index
    %c0_36 = arith.constant 0 : index
    %39 = vector.load %arg4[%c5_34, %c0_35, %c0_36] : memref<8x8x256xf32, #tpu.memory_space<vmem>>, vector<1x8x256xf32>
    %40 = vector.shape_cast %39 : vector<1x8x256xf32> to vector<8x256xf32>
    %41 = vector.shape_cast %38 : vector<8x256xf32> to vector<1x8x256xf32>
    tpu.vector_store %arg4[%c5_34, %c0_35, %c0_36], %41 {strides = array<i32>} : memref<8x8x256xf32, #tpu.memory_space<vmem>>, vector<1x8x256xf32>,
    %c0_37 = arith.constant 0 : index
    %c1536 = arith.constant 1536 : index
    %42 = vector.load %arg2[%c0_37, %c1536] : memref<8x2048xf32, #tpu.memory_space<vmem>>, vector<8x256xf32>
    %c6 = arith.constant 6 : index
    %c0_38 = arith.constant 0 : index
    %c0_39 = arith.constant 0 : index
    %43 = vector.load %arg3[%c6, %c0_38, %c0_39] : memref<8x8x256xf32, #tpu.memory_space<vmem>>, vector<1x8x256xf32>
    %44 = vector.shape_cast %43 : vector<1x8x256xf32> to vector<8x256xf32>
    %45 = arith.addf %42, %44 : vector<8x256xf32>
    %c6_40 = arith.constant 6 : index
    %c0_41 = arith.constant 0 : index
    %c0_42 = arith.constant 0 : index
    %46 = vector.load %arg4[%c6_40, %c0_41, %c0_42] : memref<8x8x256xf32, #tpu.memory_space<vmem>>, vector<1x8x256xf32>
    %47 = vector.shape_cast %46 : vector<1x8x256xf32> to vector<8x256xf32>
    %48 = vector.shape_cast %45 : vector<8x256xf32> to vector<1x8x256xf32>
    tpu.vector_store %arg4[%c6_40, %c0_41, %c0_42], %48 {strides = array<i32>} : memref<8x8x256xf32, #tpu.memory_space<vmem>>, vector<1x8x256xf32>,
    %c0_43 = arith.constant 0 : index
    %c1792 = arith.constant 1792 : index
    %49 = vector.load %arg2[%c0_43, %c1792] : memref<8x2048xf32, #tpu.memory_space<vmem>>, vector<8x256xf32>
    %c7 = arith.constant 7 : index
    %c0_44 = arith.constant 0 : index
    %c0_45 = arith.constant 0 : index
    %50 = vector.load %arg3[%c7, %c0_44, %c0_45] : memref<8x8x256xf32, #tpu.memory_space<vmem>>, vector<1x8x256xf32>
    %51 = vector.shape_cast %50 : vector<1x8x256xf32> to vector<8x256xf32>
    %52 = arith.addf %49, %51 : vector<8x256xf32>
    %c7_46 = arith.constant 7 : index
    %c0_47 = arith.constant 0 : index
    %c0_48 = arith.constant 0 : index
    %53 = vector.load %arg4[%c7_46, %c0_47, %c0_48] : memref<8x8x256xf32, #tpu.memory_space<vmem>>, vector<1x8x256xf32>
    %54 = vector.shape_cast %53 : vector<1x8x256xf32> to vector<8x256xf32>
    %55 = vector.shape_cast %52 : vector<8x256xf32> to vector<1x8x256xf32>
    tpu.vector_store %arg4[%c7_46, %c0_47, %c0_48], %55 {strides = array<i32>} : memref<8x8x256xf32, #tpu.memory_space<vmem>>, vector<1x8x256xf32>,
    return
  }
  func.func @transform_0(%arg0: i32, %arg1: i32) -> (i32, i32) {
    %c0_i32 = arith.constant 0 : i32
    return %arg1, %arg0 : i32, i32
  }
  func.func @transform_1(%arg0: i32, %arg1: i32) -> (i32, i32, i32) {
    %c0_i32 = arith.constant 0 : i32
    %c0_i32_0 = arith.constant 0 : i32
    return %arg0, %arg1, %c0_i32 : i32, i32, i32
  }
  func.func @transform_2(%arg0: i32, %arg1: i32) -> (i32, i32, i32) {
    %c0_i32 = arith.constant 0 : i32
    %c0_i32_0 = arith.constant 0 : i32
    return %arg0, %arg1, %c0_i32 : i32, i32, i32
  }
}

</mosaic_0001>

<llo_original>
// kernel: normalize_layer_forward.1
$region0: #{normalize_layer_forward.1}
  #allocation0 [shape = 'u32[]', space=smem, size = 0x4, offset = 0x4, fixed_abs, tag = 'smem constant byte address 0x4 - core index']
  #allocation1 [shape = 'u32[144,128]{1,0:T(1,128)}', space=vmem, size = 0x12000, scoped, tag = 'internal scratch']
  %s0 = inlined_call_operand.vmem [shape: f32[8,4096], index: 0, kind: input, shape index: {}]
  %s1 = inlined_call_operand.vmem [shape: f32[16,8,256], index: 1, kind: input, shape index: {}]
  %s2 = inlined_call_operand.hbm [shape: f32[16,8,256], index: 2, kind: output, shape index: {}]
  %s3 = sld [smem:[#allocation0]]
  $region41: #{normalize_layer_forward.1} parent=0
    _
  %s5 = ssub.s32 1, %s3
  %s6 = scalar_select 0, %s5, %s3
  $region1: #{normalize_layer_forward.1} parent=0
    #allocation2 [shape = 'u8[131072]{0}', space=vmem, size = 0x20000, scoped, tag = 'output window, operand 0']
    #allocation3 [shape = 's32[2]{0}', space=sflag, size = 0x8, scoped, tag = 'scoped memory for normalize_layer_forward.1']
    %7 = vsyncpa [#allocation3], 0
    %s8 = scalar_lea.sflag [#allocation3], 1
    %9 = vsyncpa %s8, 0
    loop: start=0, step=1, limit=4
    $region2: #{normalize_layer_forward.1} parent=1 // loop_pre_header
      _
    $region3: #{normalize_layer_forward.1} parent=1 // loop_header
      %s11 = sphi 0, %s15
      %p12 = scmp.ge.s32.totalorder %s11, 4
      %s18 = sphi 0, %s30
      %s19 = sphi 0, %s26
      %s20 = sphi 0, %s18
      %s21 = sphi 0, %s19
      %s22 = sphi 0, %s20
      %s23 = sphi 0, %s21
      %s35 = sphi 0, %s37
      %s38 = sphi 0, %s35
      %s39 = sphi 0, %s38
      %s55 = sphi 0, %s39
      %s63 = sphi 0, %s65
      %s66 = sphi 0, %s63
      %s67 = sphi 0, %s66
      %s83 = sphi 0, %s67
      %s91 = sphi 0, %s93
      %s94 = sphi 0, %s91
      %s95 = sphi 0, %s94
      %s111 = sphi 0, %s95
    $region4: #{normalize_layer_forward.1} parent=1 // loop_header_branch
      %14 = sbr.rel (%p12) target = $region8
    $region5: #{normalize_layer_forward.1} parent=1 // loop_body
      %s16 = ssub.s32 %s11, 1
      %s17 = ssub.s32 %s11, 2
      %s24 = sadd.s32 1, %s19
      %p25 = scmp.ge.s32.totalorder %s24, 1
      %s26 = scalar_select %p25, 0, %s24
      %s27 = sadd.s32 1, %s18
      %s28 = scalar_select %p25, %s27, %s18
      %p29 = scmp.ge.s32.totalorder %s28, 2
      %s30 = scalar_select %p29, 0, %s28
      %s31 = ssub.s32 %s19, %s26
      %s32 = ssub.s32 %s18, %s30
      %s33 = sor.u32 %s31, %s32
      %p34 = scmp.eq.s32.totalorder %s33, 0
      %s36 = sadd.s32 %s35, 1
      %s37 = scalar_select %p34, %s35, %s36
      %p40 = pneg %p34
      %p41 = scmp.eq.s32.totalorder %s11, 1
      %p42 = por %p40, %p41
      %p43 = scmp.ne.s32.totalorder %s35, %s38
      %p44 = scmp.eq.s32.totalorder %s11, 0
      %p45 = por %p43, %p44
      %p46 = scmp.ne.s32.totalorder %s35, %s38
      %p47 = scmp.eq.s32.totalorder %s16, 1
      %p48 = por %p46, %p47
      %p49 = scmp.ne.s32.totalorder %s38, %s39
      %p50 = scmp.eq.s32.totalorder %s16, 0
      %p51 = por %p49, %p50
      %p52 = scmp.ne.s32.totalorder %s38, %s39
      %p53 = scmp.eq.s32.totalorder %s17, 1
      %p54 = por %p52, %p53
      %p56 = scmp.ne.s32.totalorder %s39, %s55
      %p57 = scmp.eq.s32.totalorder %s17, 0
      %p58 = por %p56, %p57
      %s59 = ssub.s32 %s18, %s30
      %s60 = ssub.s32 %s19, %s26
      %s61 = sor.u32 %s59, %s60
      %p62 = scmp.eq.s32.totalorder %s61, 0
      %s64 = sadd.s32 %s63, 1
      %s65 = scalar_select %p62, %s63, %s64
      %p68 = pneg %p62
      %p69 = scmp.eq.s32.totalorder %s11, 1
      %p70 = por %p68, %p69
      %p71 = scmp.ne.s32.totalorder %s63, %s66
      %p72 = scmp.eq.s32.totalorder %s11, 0
      %p73 = por %p71, %p72
      %p74 = scmp.ne.s32.totalorder %s63, %s66
      %p75 = scmp.eq.s32.totalorder %s16, 1
      %p76 = por %p74, %p75
      %p77 = scmp.ne.s32.totalorder %s66, %s67
      %p78 = scmp.eq.s32.totalorder %s16, 0
      %p79 = por %p77, %p78
      %p80 = scmp.ne.s32.totalorder %s66, %s67
      %p81 = scmp.eq.s32.totalorder %s17, 1
      %p82 = por %p80, %p81
      %p84 = scmp.ne.s32.totalorder %s67, %s83
      %p85 = scmp.eq.s32.totalorder %s17, 0
      %p86 = por %p84, %p85
      %s87 = ssub.s32 %s18, %s30
      %s88 = ssub.s32 %s19, %s26
      %s89 = sor.u32 %s87, %s88
      %p90 = scmp.eq.s32.totalorder %s89, 0
      %s92 = sadd.s32 %s91, 1
      %s93 = scalar_select %p90, %s91, %s92
      %p96 = pneg %p90
      %p97 = scmp.eq.s32.totalorder %s11, 1
      %p98 = por %p96, %p97
      %p99 = scmp.ne.s32.totalorder %s91, %s94
      %p100 = scmp.eq.s32.totalorder %s11, 0
      %p101 = por %p99, %p100
      %p102 = scmp.ne.s32.totalorder %s91, %s94
      %p103 = scmp.eq.s32.totalorder %s16, 1
      %p104 = por %p102, %p103
      %p105 = scmp.ne.s32.totalorder %s94, %s95
      %p106 = scmp.eq.s32.totalorder %s16, 0
      %p107 = por %p105, %p106
      %p108 = scmp.ne.s32.totalorder %s94, %s95
      %p109 = scmp.eq.s32.totalorder %s17, 1
      %p110 = por %p108, %p109
      %p112 = scmp.ne.s32.totalorder %s95, %s111
      %p113 = scmp.eq.s32.totalorder %s17, 0
      %p114 = por %p112, %p113
      %p115 = scmp.le.s32.totalorder 1, %s11
      %p116 = scmp.lt.s32.totalorder %s11, 3
      %p117 = pnand %p115, %p116
      %p118 = pneg %p117
      // Predicated region
      $region9: #{normalize_layer_forward.1} parent=5 // pred_check
        _
      $region10: #{normalize_layer_forward.1} parent=5 // pred_check_branch
        %120 = sbr.rel (%p117) target = $region12
      $region11: #{normalize_layer_forward.1} parent=5 // pred_region
        %s121 = ssub.s32 %s11, 1
      $region12: #{normalize_layer_forward.1} parent=5 // pred_fallthru
        _
      %p122 = scmp.lt.s32.totalorder %s11, 2
      // Predicated region
      $region13: #{normalize_layer_forward.1} parent=5 // pred_check
        %p123 = pneg %p122
      $region14: #{normalize_layer_forward.1} parent=5 // pred_check_branch
        %125 = sbr.rel (%p123) target = $region16
      $region15: #{normalize_layer_forward.1} parent=5 // pred_region
        // Predicated region
        $region17: #{normalize_layer_forward.1} parent=15 // pred_check
          %p126 = pneg %p45
        $region18: #{normalize_layer_forward.1} parent=15 // pred_check_branch
          %128 = sbr.rel (%p126) target = $region20
        $region19: #{normalize_layer_forward.1} parent=15 // pred_region
          %s129 = smul.u32 16, %s18
          %p130 = scmp.lt.s32.totalorder %s19, 0
          %s131 = scalar_select %p130, %s19, 0
          %p132 = scmp.lt.s32.totalorder %s129, 31
          %s133 = scalar_select %p132, %s129, 31
          %s134 = smul.addr %s131, 32
          %s135 = sadd.s32 %s133, %s134
          %s136 = smul.addr %s135, 8
          %s137 = scalar_lea.vmem %s0, %s136
          %s138 = smul.u32 16, %s18
        $region20: #{normalize_layer_forward.1} parent=15 // pred_fallthru
          _
        // Predicated region
        $region21: #{normalize_layer_forward.1} parent=15 // pred_check
          %p139 = pneg %p73
        $region22: #{normalize_layer_forward.1} parent=15 // pred_check_branch
          %141 = sbr.rel (%p139) target = $region24
        $region23: #{normalize_layer_forward.1} parent=15 // pred_region
          %s142 = smul.u32 8, %s18
          %p143 = scmp.lt.s32.totalorder %s142, 15
          %s144 = scalar_select %p143, %s142, 15
          %p145 = scmp.lt.s32.totalorder %s19, 0
          %s146 = scalar_select %p145, %s19, 0
          %s147 = smul.addr %s146, 2
          %s148 = smul.addr %s144, 2
          %s149 = sadd.s32 %s147, %s148
          %s150 = smul.addr %s149, 8
          %s151 = scalar_lea.vmem %s1, %s150
          %s152 = smul.u32 8, %s18
        $region24: #{normalize_layer_forward.1} parent=15 // pred_fallthru
          _
      $region16: #{normalize_layer_forward.1} parent=5 // pred_fallthru
        _
      %p153 = scmp.le.s32.totalorder 1, %s11
      %p154 = scmp.lt.s32.totalorder %s11, 3
      %p155 = pnand %p153, %p154
      %p156 = pneg %p155
      // Predicated region
      $region25: #{normalize_layer_forward.1} parent=5 // pred_check
        _
      $region26: #{normalize_layer_forward.1} parent=5 // pred_check_branch
        %158 = sbr.rel (%p155) target = $region28
      $region27: #{normalize_layer_forward.1} parent=5 // pred_region
        %s159 = ssub.s32 %s11, 1
        %s160 = smul.u32 16, %s20
        %p161 = scmp.lt.s32.totalorder %s21, 0
        %s162 = scalar_select %p161, %s21, 0
        %p163 = scmp.lt.s32.totalorder %s160, 31
        %s164 = scalar_select %p163, %s160, 31
        %s165 = smul.addr %s162, 32
        %s166 = sadd.s32 %s164, %s165
        %s167 = smul.addr %s166, 8
        %s168 = scalar_lea.vmem %s0, %s167
        %p169 = pneg %p51
        %p170 = pneg %p48
        %s171 = smul.u32 8, %s20
        %p172 = scmp.lt.s32.totalorder %s171, 15
        %s173 = scalar_select %p172, %s171, 15
        %p174 = scmp.lt.s32.totalorder %s21, 0
        %s175 = scalar_select %p174, %s21, 0
        %s176 = smul.addr %s175, 2
        %s177 = smul.addr %s173, 2
        %s178 = sadd.s32 %s176, %s177
        %s179 = smul.addr %s178, 8
        %s180 = scalar_lea.vmem %s1, %s179
        %p181 = pneg %p79
        %p182 = pneg %p76
        %p183 = pneg %p107
        %p184 = pneg %p104
        %s185 = sand.u32 %s94, 1
        %s186 = scalar_lea.sflag [#allocation3], %s185
        %s187 = sand.u32 %s94, 1
        %s188 = smul.addr %s187, 128
        %s189 = scalar_lea.vmem [#allocation2], %s188
        %s190 = smul.u32 16, %s20
        %p191 = scmp.lt.s32.totalorder %s21, 0
        %s192 = scalar_select %p191, %s21, 0
        %p193 = scmp.lt.s32.totalorder %s190, 31
        %s194 = scalar_select %p193, %s190, 31
        %s195 = smul.addr %s192, 32
        %s196 = sadd.s32 %s194, %s195
        %s197 = smul.addr %s196, 8
        %s198 = scalar_lea.vmem %s0, %s197
        %s199 = smul.u32 16, %s20
        %s200 = smul.u32 8, %s20
        %p201 = scmp.lt.s32.totalorder %s200, 15
        %s202 = scalar_select %p201, %s200, 15
        %p203 = scmp.lt.s32.totalorder %s21, 0
        %s204 = scalar_select %p203, %s21, 0
        %s205 = smul.addr %s204, 2
        %s206 = smul.addr %s202, 2
        %s207 = sadd.s32 %s205, %s206
        %s208 = smul.addr %s207, 8
        %s209 = scalar_lea.vmem %s1, %s208
        %s210 = smul.u32 8, %s20
        %s211 = smul.u32 8, %s20
        %v212 = vld [vmem:[%s198] sm:$0xff]
        %v213 = vld [vmem:[%s198 + $0x8] sm:$0xff]
        %v214 = vld [vmem:[%s209] sm:$0xff]
        %v215 = vld [vmem:[%s209 + $0x8] sm:$0xff]
        %v216 = vadd.f32 %v212, %v214
        %v217 = vadd.f32 %v213, %v215
        %218 = vst [vmem:[%s189] sm:$0xff] %v216
        %219 = vst [vmem:[%s189 + $0x8] sm:$0xff] %v217
        %v220 = vld [vmem:[%s198 + $0x10] sm:$0xff]
        %v221 = vld [vmem:[%s198 + $0x18] sm:$0xff]
        %s222 = scalar_lea.vmem %s209, 16
        %v223 = vld [vmem:[%s222] sm:$0xff]
        %v224 = vld [vmem:[%s222 + $0x8] sm:$0xff]
        %v225 = vadd.f32 %v220, %v223
        %v226 = vadd.f32 %v221, %v224
        %s227 = scalar_lea.vmem %s189, 16 [#allocation2]
        %228 = vst [vmem:[%s227] sm:$0xff] %v225
        %229 = vst [vmem:[%s227 + $0x8] sm:$0xff] %v226
        %v230 = vld [vmem:[%s198 + $0x20] sm:$0xff]
        %v231 = vld [vmem:[%s198 + $0x28] sm:$0xff]
        %s232 = scalar_lea.vmem %s209, 32
        %v233 = vld [vmem:[%s232] sm:$0xff]
        %v234 = vld [vmem:[%s232 + $0x8] sm:$0xff]
        %v235 = vadd.f32 %v230, %v233
        %v236 = vadd.f32 %v231, %v234
        %s237 = scalar_lea.vmem %s189, 32 [#allocation2]
        %238 = vst [vmem:[%s237] sm:$0xff] %v235
        %239 = vst [vmem:[%s237 + $0x8] sm:$0xff] %v236
        %v240 = vld [vmem:[%s198 + $0x30] sm:$0xff]
        %v241 = vld [vmem:[%s198 + $0x38] sm:$0xff]
        %s242 = scalar_lea.vmem %s209, 48
        %v243 = vld [vmem:[%s242] sm:$0xff]
        %v244 = vld [vmem:[%s242 + $0x8] sm:$0xff]
        %v245 = vadd.f32 %v240, %v243
        %v246 = vadd.f32 %v241, %v244
        %s247 = scalar_lea.vmem %s189, 48 [#allocation2]
        %248 = vst [vmem:[%s247] sm:$0xff] %v245
        %249 = vst [vmem:[%s247 + $0x8] sm:$0xff] %v246
        %v250 = vld [vmem:[%s198 + $0x40] sm:$0xff]
        %v251 = vld [vmem:[%s198 + $0x48] sm:$0xff]
        %s252 = scalar_lea.vmem %s209, 64
        %v253 = vld [vmem:[%s252] sm:$0xff]
        %v254 = vld [vmem:[%s252 + $0x8] sm:$0xff]
        %v255 = vadd.f32 %v250, %v253
        %v256 = vadd.f32 %v251, %v254
        %s257 = scalar_lea.vmem %s189, 64 [#allocation2]
        %258 = vst [vmem:[%s257] sm:$0xff] %v255
        %259 = vst [vmem:[%s257 + $0x8] sm:$0xff] %v256
        %v260 = vld [vmem:[%s198 + $0x50] sm:$0xff]
        %v261 = vld [vmem:[%s198 + $0x58] sm:$0xff]
        %s262 = scalar_lea.vmem %s209, 80
        %v263 = vld [vmem:[%s262] sm:$0xff]
        %v264 = vld [vmem:[%s262 + $0x8] sm:$0xff]
        %v265 = vadd.f32 %v260, %v263
        %v266 = vadd.f32 %v261, %v264
        %s267 = scalar_lea.vmem %s189, 80 [#allocation2]
        %268 = vst [vmem:[%s267] sm:$0xff] %v265
        %269 = vst [vmem:[%s267 + $0x8] sm:$0xff] %v266
        %v270 = vld [vmem:[%s198 + $0x60] sm:$0xff]
        %v271 = vld [vmem:[%s198 + $0x68] sm:$0xff]
        %s272 = scalar_lea.vmem %s209, 96
        %v273 = vld [vmem:[%s272] sm:$0xff]
        %v274 = vld [vmem:[%s272 + $0x8] sm:$0xff]
        %v275 = vadd.f32 %v270, %v273
        %v276 = vadd.f32 %v271, %v274
        %s277 = scalar_lea.vmem %s189, 96 [#allocation2]
        %278 = vst [vmem:[%s277] sm:$0xff] %v275
        %279 = vst [vmem:[%s277 + $0x8] sm:$0xff] %v276
        %v280 = vld [vmem:[%s198 + $0x70] sm:$0xff]
        %v281 = vld [vmem:[%s198 + $0x78] sm:$0xff]
        %s282 = scalar_lea.vmem %s209, 112
        %v283 = vld [vmem:[%s282] sm:$0xff]
        %v284 = vld [vmem:[%s282 + $0x8] sm:$0xff]
        %v285 = vadd.f32 %v280, %v283
        %v286 = vadd.f32 %v281, %v284
        %s287 = scalar_lea.vmem %s189, 112 [#allocation2]
        %288 = vst [vmem:[%s287] sm:$0xff] %v285
        %289 = vst [vmem:[%s287 + $0x8] sm:$0xff] %v286
        %s290 = sand.u32 %s94, 1
        %s291 = scalar_lea.sflag [#allocation3], %s290
        %s292 = sand.u32 %s94, 1
        %s293 = smul.addr %s292, 128
        %s294 = scalar_lea.vmem [#allocation2], %s293
        // Predicated region
        $region29: #{normalize_layer_forward.1} parent=27 // pred_check
          %p295 = pneg %p104
        $region30: #{normalize_layer_forward.1} parent=27 // pred_check_branch
          %297 = sbr.rel (%p295) target = $region32
        $region31: #{normalize_layer_forward.1} parent=27 // pred_region
          %s298 = smul.u32 8, %s20
          %s300 = ssub.s32 2048, 2048
          %301 = vsyncadd %s291, %s300
          %s302 = smul.addr %s21, 2
          %s303 = smul.addr %s298, 2
          %s304 = sadd.s32 %s302, %s303
          %s305 = smul.addr %s304, 128
          %s306 = scalar_lea.hbm %s2, %s305
          %s307 = sshll.u32 %s294, 4
          %s308 = int_to_ptr.vmem [resolvable:$true] %s307
          %313 = dma.vmem_to_hbm [thread:$0]  %s308, 2048, %s306, %s291, 256, 256, 16
        $region32: #{normalize_layer_forward.1} parent=27 // pred_fallthru
          _
      $region28: #{normalize_layer_forward.1} parent=5 // pred_fallthru
        _
      %p314 = scmp.le.s32.totalorder 2, %s11
      // Predicated region
      $region33: #{normalize_layer_forward.1} parent=5 // pred_check
        %p315 = pneg %p314
      $region34: #{normalize_layer_forward.1} parent=5 // pred_check_branch
        %317 = sbr.rel (%p315) target = $region36
      $region35: #{normalize_layer_forward.1} parent=5 // pred_region
        %s318 = ssub.s32 %s11, 2
        // Predicated region
        $region37: #{normalize_layer_forward.1} parent=35 // pred_check
          %p319 = pneg %p110
        $region38: #{normalize_layer_forward.1} parent=35 // pred_check_branch
          %321 = sbr.rel (%p319) target = $region40
        $region39: #{normalize_layer_forward.1} parent=35 // pred_region
          %s322 = sand.u32 %s95, 1
          %s323 = scalar_lea.sflag [#allocation3], %s322
          %s324 = sand.u32 %s95, 1
          %s325 = smul.addr %s324, 128
          %s326 = scalar_lea.vmem [#allocation2], %s325
          %327 = dma.done %s323, 2048
        $region40: #{normalize_layer_forward.1} parent=35 // pred_fallthru
          _
      $region36: #{normalize_layer_forward.1} parent=5 // pred_fallthru
        _
    $region6: #{normalize_layer_forward.1} parent=1 // loop_footer
      %s15 = sadd.s32 1, %s11
    $region7: #{normalize_layer_forward.1} parent=1 // loop_footer_branch
      %10 = sbr.rel target = $region3
    $region8: #{normalize_layer_forward.1} parent=1 // loop_exit
      _
    %328 = vsyncpa [#allocation3], 1
    %s329 = scalar_lea.sflag [#allocation3], 1
    %330 = vsyncpa %s329, 1

</llo_original>
